<compile_context>
chip_gen: v6e
topology: v6e:2x2x1
jax: 0.10.0
libtpu: 0.0.40
codegen_flags: <defaults>
</compile_context>

<pallas_src>
import functools

import jax
import jax.numpy as jnp
from jax.experimental import pallas as pl
from jax.experimental.pallas import tpu as pltpu

LANE = 128    # hidden feature dims padded to one full lane width
OUT_PAD = 8   # logits padded only to 8 lanes (cuts output HBM traffic 16x)
OUT_DIM = 3   # real number of classes


def mlp_kernel(x_ref, w1_ref, b1_ref, w2_ref, b2_ref, w3_ref, b3_ref, o_ref):
    # fc1 + relu : (B, 4) @ (4, 128) -> (B, 128)
    h1 = jnp.dot(x_ref[...], w1_ref[...], preferred_element_type=jnp.float32)
    h1 = jnp.maximum(h1 + b1_ref[...], 0.0)
    # fc2 + relu : (B, 128) @ (128, 128) -> (B, 128)
    h2 = jnp.dot(h1, w2_ref[...], preferred_element_type=jnp.float32)
    h2 = jnp.maximum(h2 + b2_ref[...], 0.0)
    # fc3 (no activation, matches PyTorch forward) : (B, 128) @ (128, 8)
    h3 = jnp.dot(h2, w3_ref[...], preferred_element_type=jnp.float32)
    o_ref[...] = (h3 + b3_ref[...]).astype(o_ref.dtype)


def _pad2(a, rows, cols):
    return jnp.pad(a, ((0, rows - a.shape[0]), (0, cols - a.shape[1])))


def pad_params(w1, b1, w2, b2, w3, b3):
    """Pad parameters to TPU-friendly shapes ONCE (hoisted out of the forward).

    Zero-padded weight columns stay zero through bias-add + ReLU, so the extra
    lanes never contaminate the real outputs.
    """
    w1p = _pad2(w1, w1.shape[0], LANE)   # (4, 128)
    b1p = _pad2(b1, 1, LANE)             # (1, 128)
    w2p = _pad2(w2, LANE, LANE)          # (128, 128)
    b2p = _pad2(b2, 1, LANE)             # (1, 128)
    w3p = _pad2(w3, LANE, OUT_PAD)       # (128, 8)
    b3p = _pad2(b3, 1, OUT_PAD)          # (1, 8)
    return tuple(jax.device_put(p) for p in (w1p, b1p, w2p, b2p, w3p, b3p))


@jax.jit
def _mlp_single(x, w1p, b1p, w2p, b2p, w3p, b3p):
    """Small-batch path: one un-gridded pallas_call, whole problem in VMEM.

    No grid -> no per-step pipeline overhead, no batch padding needed (the
    (8,128) block rule does not apply to full-array blocks).
    """
    B = x.shape[0]
    out = pl.pallas_call(
        mlp_kernel,
        out_shape=jax.ShapeDtypeStruct((B, OUT_PAD), jnp.float32),
    )(x, w1p, b1p, w2p, b2p, w3p, b3p)
    return out[:, :OUT_DIM]


@functools.partial(jax.jit, static_argnames=("tb",))
def _mlp_tiled(x, w1p, b1p, w2p, b2p, w3p, b3p, *, tb=512):
    """Large-batch path: stream 512-row batch tiles; weights stay resident."""
    B, in_dim = x.shape
    b_pad = pl.cdiv(B, tb) * tb
    xp = jnp.pad(x, ((0, b_pad - B), (0, 0)))

    # Weights/biases: block index (0, 0) every step -> resident in VMEM,
    # DMA'd once (do NOT stream these per tile).
    resident = lambda shape: pl.BlockSpec(shape, lambda i: (0, 0))

    out_padded = pl.pallas_call(
        mlp_kernel,
        out_shape=jax.ShapeDtypeStruct((b_pad, OUT_PAD), jnp.float32),
        grid=(b_pad // tb,),
        in_specs=[
            pl.BlockSpec((tb, in_dim), lambda i: (i, 0)),  # x tile (streamed)
            resident((in_dim, LANE)),                      # w1
            resident((1, LANE)),                           # b1
            resident((LANE, LANE)),                        # w2
            resident((1, LANE)),                           # b2
            resident((LANE, OUT_PAD)),                     # w3
            resident((1, OUT_PAD)),                        # b3
        ],
        out_specs=pl.BlockSpec((tb, OUT_PAD), lambda i: (i, 0)),
        compiler_params=pltpu.CompilerParams(
            dimension_semantics=("parallel",)),            # v7x megacore split
    )(xp, w1p, b1p, w2p, b2p, w3p, b3p)

    return out_padded[:B, :OUT_DIM]


def mlp_forward(x, padded_params, *, small_batch_threshold=1024, tb=512):
    """Forward pass of Net: relu(fc1) -> relu(fc2) -> fc3. Returns (B, 3)."""
    if x.shape[0] <= small_batch_threshold:
        return _mlp_single(x, *padded_params)
    return _mlp_tiled(x, *padded_params, tb=tb)


def init_params(key):
    # Deterministic PyTorch-style init: U(-1/sqrt(fan_in), 1/sqrt(fan_in)).
    dims = [(4, 10), (10, 8), (8, 3)]
    params = []
    for i, (fin, fout) in enumerate(dims):
        kw, kb = jax.random.split(jax.random.fold_in(key, i))
        bound = 1.0 / jnp.sqrt(fin)
        w = jax.random.uniform(kw, (fin, fout), jnp.float32, -bound, bound)
        b = jax.random.uniform(kb, (1, fout), jnp.float32, -bound, bound)
        params += [w, b]
    return params


def _reference(x, w1, b1, w2, b2, w3, b3):
    h = jnp.maximum(x @ w1 + b1, 0.0)
    h = jnp.maximum(h @ w2 + b2, 0.0)
    return h @ w3 + b3


if __name__ == "__main__":
    key = jax.random.PRNGKey(0)
    kx, kp = jax.random.split(key)
    w1, b1, w2, b2, w3, b3 = init_params(kp)

    # Pad parameters exactly once (hoisted out of the forward call).
    padded = pad_params(w1, b1, w2, b2, w3, b3)

    # --- iris-sized batch -> single no-grid invocation ---
    B = 150
    x = jax.random.normal(kx, (B, 4), jnp.float32)
    out = mlp_forward(x, padded)
    jax.block_until_ready(out)
    assert out.shape == (B, OUT_DIM)
    ref = _reference(x, w1, b1, w2, b2, w3, b3)
    assert jnp.allclose(out, ref, atol=1e-5), "small-batch mismatch vs reference"

    # --- larger batch -> tiled path (tb=512, even grid for v7x megacore) ---
    B2 = 2048
    x2 = jax.random.normal(jax.random.fold_in(kx, 1), (B2, 4), jnp.float32)
    out2 = mlp_forward(x2, padded)
    jax.block_until_ready(out2)
    assert out2.shape == (B2, OUT_DIM)
    ref2 = _reference(x2, w1, b1, w2, b2, w3, b3)
    assert jnp.allclose(out2, ref2, atol=1e-5), "tiled-batch mismatch vs reference"

    print("KERNEL_OK")
</pallas_src>

<mosaic_0001>
module attributes {stable_mosaic.version = 11 : i64} {
  func.func @mlp_kernel(%arg0: memref<150x4xf32, #tpu.memory_space<vmem>>, %arg1: memref<4x128xf32, #tpu.memory_space<vmem>>, %arg2: memref<1x128xf32, #tpu.memory_space<vmem>>, %arg3: memref<128x128xf32, #tpu.memory_space<vmem>>, %arg4: memref<1x128xf32, #tpu.memory_space<vmem>>, %arg5: memref<128x8xf32, #tpu.memory_space<vmem>>, %arg6: memref<1x8xf32, #tpu.memory_space<vmem>>, %arg7: memref<150x8xf32, #tpu.memory_space<vmem>>) attributes {dimension_semantics = [], scalar_prefetch = 0 : i64, scratch_operands = 0 : i64, tpu.core_type = #tpu.core_type<tc>} {
    %c0 = arith.constant 0 : index
    %c0_0 = arith.constant 0 : index
    %0 = vector.load %arg0[%c0, %c0_0] : memref<150x4xf32, #tpu.memory_space<vmem>>, vector<150x4xf32>
    %c0_1 = arith.constant 0 : index
    %c0_2 = arith.constant 0 : index
    %1 = vector.load %arg1[%c0_1, %c0_2] : memref<4x128xf32, #tpu.memory_space<vmem>>, vector<4x128xf32>
    %cst = arith.constant dense<0.000000e+00> : vector<150x128xf32>
    %2 = tpu.matmul %0, %1, %cst {dimension_numbers = #tpu.dot_dimension_numbers<[1], [0], [0], [1], [0, 0, 1, 1], [], []>} : vector<150x4xf32>, vector<4x128xf32>, vector<150x128xf32> -> vector<150x128xf32>
    %c0_3 = arith.constant 0 : index
    %c0_4 = arith.constant 0 : index
    %3 = vector.load %arg2[%c0_3, %c0_4] : memref<1x128xf32, #tpu.memory_space<vmem>>, vector<1x128xf32>
    %4 = vector.broadcast %3 : vector<1x128xf32> to vector<150x128xf32>
    %5 = arith.addf %2, %4 : vector<150x128xf32>
    %cst_5 = arith.constant 0.000000e+00 : f32
    %6 = vector.broadcast %cst_5 : f32 to vector<150x128xf32>
    %7 = arith.maximumf %5, %6 : vector<150x128xf32>
    %c0_6 = arith.constant 0 : index
    %c0_7 = arith.constant 0 : index
    %8 = vector.load %arg3[%c0_6, %c0_7] : memref<128x128xf32, #tpu.memory_space<vmem>>, vector<128x128xf32>
    %cst_8 = arith.constant dense<0.000000e+00> : vector<150x128xf32>
    %9 = tpu.matmul %7, %8, %cst_8 {dimension_numbers = #tpu.dot_dimension_numbers<[1], [0], [0], [1], [0, 0, 1, 1], [], []>} : vector<150x128xf32>, vector<128x128xf32>, vector<150x128xf32> -> vector<150x128xf32>
    %c0_9 = arith.constant 0 : index
    %c0_10 = arith.constant 0 : index
    %10 = vector.load %arg4[%c0_9, %c0_10] : memref<1x128xf32, #tpu.memory_space<vmem>>, vector<1x128xf32>
    %11 = vector.broadcast %10 : vector<1x128xf32> to vector<150x128xf32>
    %12 = arith.addf %9, %11 : vector<150x128xf32>
    %cst_11 = arith.constant 0.000000e+00 : f32
    %13 = vector.broadcast %cst_11 : f32 to vector<150x128xf32>
    %14 = arith.maximumf %12, %13 : vector<150x128xf32>
    %c0_12 = arith.constant 0 : index
    %c0_13 = arith.constant 0 : index
    %15 = vector.load %arg5[%c0_12, %c0_13] : memref<128x8xf32, #tpu.memory_space<vmem>>, vector<128x8xf32>
    %cst_14 = arith.constant dense<0.000000e+00> : vector<150x8xf32>
    %16 = tpu.matmul %14, %15, %cst_14 {dimension_numbers = #tpu.dot_dimension_numbers<[1], [0], [0], [1], [0, 0, 1, 1], [], []>} : vector<150x128xf32>, vector<128x8xf32>, vector<150x8xf32> -> vector<150x8xf32>
    %c0_15 = arith.constant 0 : index
    %c0_16 = arith.constant 0 : index
    %17 = vector.load %arg6[%c0_15, %c0_16] : memref<1x8xf32, #tpu.memory_space<vmem>>, vector<1x8xf32>
    %18 = vector.broadcast %17 : vector<1x8xf32> to vector<150x8xf32>
    %19 = arith.addf %16, %18 : vector<150x8xf32>
    %c0_17 = arith.constant 0 : index
    %c0_18 = arith.constant 0 : index
    %20 = vector.load %arg7[%c0_17, %c0_18] : memref<150x8xf32, #tpu.memory_space<vmem>>, vector<150x8xf32>
    tpu.vector_store %arg7[%c0_17, %c0_18], %19 {strides = array<i32>} : memref<150x8xf32, #tpu.memory_space<vmem>>, vector<150x8xf32>,
    return
  }
}

</mosaic_0001>

<llo_original>
// kernel: _mlp_single.1
$region0: #{_mlp_single.1}
  #allocation0 [shape = 'u32[]', space=smem, size = 0x4, offset = 0x4, fixed_abs, tag = 'smem constant byte address 0x4 - core index']
  #allocation1 [shape = 'u32[144,128]{1,0:T(1,128)}', space=vmem, size = 0x12000, scoped, tag = 'internal scratch']
  %s0 = inlined_call_operand.vmem [shape: f32[150,4], index: 0, kind: input, shape index: {}]
  %s1 = inlined_call_operand.vmem [shape: f32[4,128], index: 1, kind: input, shape index: {}]
  %s2 = inlined_call_operand.vmem [shape: f32[1,128], index: 2, kind: input, shape index: {}]
  %s3 = inlined_call_operand.vmem [shape: f32[128,128], index: 3, kind: input, shape index: {}]
  %s4 = inlined_call_operand.vmem [shape: f32[1,128], index: 4, kind: input, shape index: {}]
  %s5 = inlined_call_operand.vmem [shape: f32[128,8], index: 5, kind: input, shape index: {}]
  %s6 = inlined_call_operand.vmem [shape: f32[1,8], index: 6, kind: input, shape index: {}]
  %s7 = inlined_call_operand.vmem [shape: f32[150,8], index: 7, kind: output, shape index: {}]
  %s8 = sld [smem:[#allocation0]]
  $region38: #{_mlp_single.1} parent=0
    _
  %s10 = ssub.s32 1, %s8
  %s11 = scalar_select 0, %s10, %s8
  // Predicated region
  $region2: #{_mlp_single.1} parent=0 // pred_check
    _
  $region3: #{_mlp_single.1} parent=0 // pred_check_branch
    %13 = sbr.rel (0) target = $region5
  $region4: #{_mlp_single.1} parent=0 // pred_region
    _
  $region5: #{_mlp_single.1} parent=0 // pred_fallthru
    _
  // Predicated region
  $region6: #{_mlp_single.1} parent=0 // pred_check
    _
  $region7: #{_mlp_single.1} parent=0 // pred_check_branch
    %15 = sbr.rel (0) target = $region9
  $region8: #{_mlp_single.1} parent=0 // pred_region
    _
  $region9: #{_mlp_single.1} parent=0 // pred_fallthru
    _
  // Predicated region
  $region10: #{_mlp_single.1} parent=0 // pred_check
    _
  $region11: #{_mlp_single.1} parent=0 // pred_check_branch
    %17 = sbr.rel (0) target = $region13
  $region12: #{_mlp_single.1} parent=0 // pred_region
    _
  $region13: #{_mlp_single.1} parent=0 // pred_fallthru
    _
  // Predicated region
  $region14: #{_mlp_single.1} parent=0 // pred_check
    _
  $region15: #{_mlp_single.1} parent=0 // pred_check_branch
    %19 = sbr.rel (0) target = $region17
  $region16: #{_mlp_single.1} parent=0 // pred_region
    _
  $region17: #{_mlp_single.1} parent=0 // pred_fallthru
    _
  // Predicated region
  $region18: #{_mlp_single.1} parent=0 // pred_check
    _
  $region19: #{_mlp_single.1} parent=0 // pred_check_branch
    %21 = sbr.rel (0) target = $region21
  $region20: #{_mlp_single.1} parent=0 // pred_region
    _
  $region21: #{_mlp_single.1} parent=0 // pred_fallthru
    _
  // Predicated region
  $region22: #{_mlp_single.1} parent=0 // pred_check
    _
  $region23: #{_mlp_single.1} parent=0 // pred_check_branch
    %23 = sbr.rel (0) target = $region25
  $region24: #{_mlp_single.1} parent=0 // pred_region
    _
  $region25: #{_mlp_single.1} parent=0 // pred_fallthru
    _
  // Predicated region
  $region26: #{_mlp_single.1} parent=0 // pred_check
    _
  $region27: #{_mlp_single.1} parent=0 // pred_check_branch
    %25 = sbr.rel (0) target = $region29
  $region28: #{_mlp_single.1} parent=0 // pred_region
    _
  $region29: #{_mlp_single.1} parent=0 // pred_fallthru
    _
  %v26 = vld [vmem:[%s0] sm:$0xff]
  %v27 = vld [vmem:[%s0 + $0x8] sm:$0xff]
  %v28 = vld [vmem:[%s0 + $0x10] sm:$0xff]
  %v29 = vld [vmem:[%s0 + $0x18] sm:$0xff]
  %v30 = vld [vmem:[%s0 + $0x20] sm:$0xff]
  %v31 = vld [vmem:[%s0 + $0x28] sm:$0xff]
  %v32 = vld [vmem:[%s0 + $0x30] sm:$0xff]
  %v33 = vld [vmem:[%s0 + $0x38] sm:$0xff]
  %v34 = vld [vmem:[%s0 + $0x40] sm:$0xff]
  %v35 = vld [vmem:[%s0 + $0x48] sm:$0xff]
  %v36 = vld [vmem:[%s0 + $0x50] sm:$0xff]
  %v37 = vld [vmem:[%s0 + $0x58] sm:$0xff]
  %v38 = vld [vmem:[%s0 + $0x60] sm:$0xff]
  %v39 = vld [vmem:[%s0 + $0x68] sm:$0xff]
  %v40 = vld [vmem:[%s0 + $0x70] sm:$0xff]
  %v41 = vld [vmem:[%s0 + $0x78] sm:$0xff]
  %v42 = vld [vmem:[%s0 + $0x80] sm:$0xff]
  %v43 = vld [vmem:[%s0 + $0x88] sm:$0xff]
  %v44 = vld [vmem:[%s0 + $0x90] sm:$0x3f]
  %v45 = vld [vmem:[%s1] sm:$0xf]
  %v46 = vld [vmem:[%s2] sm:$0x1]
  %v48 = vlaneseq
  %v49 = vshrl.u32 %v48, 7
  %v50 = vsub.s32 0, %v49
  %v51 = vrot.slane %v46, %v50
  %vm53 = vcmask 31744
  %v55 = vsel %vm53, %v26, 0
  %v58 = vsel %vm53, %v27, 0
  %v61 = vsel %vm53, %v28, 0
  %v64 = vsel %vm53, %v29, 0
  %v67 = vsel %vm53, %v30, 0
  %v70 = vsel %vm53, %v31, 0
  %v73 = vsel %vm53, %v32, 0
  %v76 = vsel %vm53, %v33, 0
  %v79 = vsel %vm53, %v34, 0
  %v82 = vsel %vm53, %v35, 0
  %v85 = vsel %vm53, %v36, 0
  %v88 = vsel %vm53, %v37, 0
  %v91 = vsel %vm53, %v38, 0
  %v94 = vsel %vm53, %v39, 0
  %v97 = vsel %vm53, %v40, 0
  %v100 = vsel %vm53, %v41, 0
  %v103 = vsel %vm53, %v42, 0
  %v106 = vsel %vm53, %v43, 0
  %v109 = vsel %vm53, %v44, 0
  %vm111 = vcmask 1043456
  %v113 = vsel %vm111, %v45, 0
  %115 = vmatprep.subr.mxu0 0.0
  %116 = vmatpush1.msra.mxu0 0.0
  %117 = vmatprep.subr.mxu0 0.0
  %118 = vmatpush1.msra.mxu0 0.0
  %119 = vmatprep.subr.mxu0 0.0
  %120 = vmatpush1.msra.mxu0 0.0
  %121 = vmatprep.subr.mxu0 0.0
  %122 = vmatpush1.msra.mxu0 0.0
  %123 = vmatprep.subr.mxu0 0.0
  %124 = vmatpush1.msra.mxu0 0.0
  %125 = vmatprep.subr.mxu0 0.0
  %126 = vmatpush1.msra.mxu0 0.0
  %127 = vmatprep.subr.mxu0 0.0
  %128 = vmatpush1.msra.mxu0 0.0
  %129 = vmatprep.subr.mxu0 0.0
  %130 = vmatpush1.msra.mxu0 0.0
  %131 = vmatprep.subr.mxu0 0.0
  %132 = vmatpush1.msra.mxu0 0.0
  %133 = vmatprep.subr.mxu0 0.0
  %134 = vmatpush1.msra.mxu0 0.0
  %135 = vmatprep.subr.mxu0 0.0
  %136 = vmatpush1.msra.mxu0 0.0
  %137 = vmatprep.subr.mxu0 0.0
  %138 = vmatpush1.msra.mxu0 0.0
  %139 = vmatprep.subr.mxu0 0.0
  %140 = vmatpush1.msra.mxu0 0.0
  %141 = vmatprep.subr.mxu0 0.0
  %142 = vmatpush1.msra.mxu0 0.0
  %143 = vmatprep.subr.mxu0 0.0
  %144 = vmatpush1.msra.mxu0 0.0
  %145 = vmatprep.subr.mxu0 0.0
  %146 = vmatpush1.msra.mxu0 %v113
  %147 = vmatprep.subr.mxu0 0.0
  %148 = vmatpush2.msra.mxu0 0.0
  %149 = vmatprep.subr.mxu0 0.0
  %150 = vmatpush2.msra.mxu0 0.0
  %151 = vmatprep.subr.mxu0 0.0
  %152 = vmatpush2.msra.mxu0 0.0
  %153 = vmatprep.subr.mxu0 0.0
  %154 = vmatpush2.msra.mxu0 0.0
  %155 = vmatprep.subr.mxu0 0.0
  %156 = vmatpush2.msra.mxu0 0.0
  %157 = vmatprep.subr.mxu0 0.0
  %158 = vmatpush2.msra.mxu0 0.0
  %159 = vmatprep.subr.mxu0 0.0
  %160 = vmatpush2.msra.mxu0 0.0
  %161 = vmatprep.subr.mxu0 0.0
  %162 = vmatpush2.msra.mxu0 0.0
  %163 = vmatprep.subr.mxu0 0.0
  %164 = vmatpush2.msra.mxu0 0.0
  %165 = vmatprep.subr.mxu0 0.0
  %166 = vmatpush2.msra.mxu0 0.0
  %167 = vmatprep.subr.mxu0 0.0
  %168 = vmatpush2.msra.mxu0 0.0
  %169 = vmatprep.subr.mxu0 0.0
  %170 = vmatpush2.msra.mxu0 0.0
  %171 = vmatprep.subr.mxu0 0.0
  %172 = vmatpush2.msra.mxu0 0.0
  %173 = vmatprep.subr.mxu0 0.0
  %174 = vmatpush2.msra.mxu0 0.0
  %175 = vmatprep.subr.mxu0 0.0
  %176 = vmatpush2.msra.mxu0 0.0
  %177 = vmatprep.subr.mxu0 0.0
  %178 = vmatpush2.msra.mxu0 0.0
  %179 = vmatprep.mubr.f32.mxu0 0.0
  %180 = vmatmul.mubr.f32.gmra.mxu0 %v55
  %v181 = vpop.f32.mrf.mxu0
  %v182 = vadd.f32 %v51, %v181
  %v183 = vpop.f32.mrf.mxu0
  %184 = vmatprep.mubr.f32.mxu0 0.0
  %185 = vmatmul.mubr.f32.gmra.mxu0 %v58
  %v186 = vpop.f32.mrf.mxu0
  %v187 = vadd.f32 %v51, %v186
  %v188 = vpop.f32.mrf.mxu0
  %189 = vmatprep.mubr.f32.mxu0 0.0
  %190 = vmatmul.mubr.f32.gmra.mxu0 %v61
  %v191 = vpop.f32.mrf.mxu0
  %v192 = vadd.f32 %v51, %v191
  %v193 = vpop.f32.mrf.mxu0
  %194 = vmatprep.mubr.f32.mxu0 0.0
  %195 = vmatmul.mubr.f32.gmra.mxu0 %v64
  %v196 = vpop.f32.mrf.mxu0
  %v197 = vadd.f32 %v51, %v196
  %v198 = vpop.f32.mrf.mxu0
  %199 = vmatprep.mubr.f32.mxu0 0.0
  %200 = vmatmul.mubr.f32.gmra.mxu0 %v67
  %v201 = vpop.f32.mrf.mxu0
  %v202 = vadd.f32 %v51, %v201
  %v203 = vpop.f32.mrf.mxu0
  %204 = vmatprep.mubr.f32.mxu0 0.0
  %205 = vmatmul.mubr.f32.gmra.mxu0 %v70
  %v206 = vpop.f32.mrf.mxu0
  %v207 = vadd.f32 %v51, %v206
  %v208 = vpop.f32.mrf.mxu0
  %209 = vmatprep.mubr.f32.mxu0 0.0
  %210 = vmatmul.mubr.f32.gmra.mxu0 %v73
  %v211 = vpop.f32.mrf.mxu0
  %v212 = vadd.f32 %v51, %v211
  %v213 = vpop.f32.mrf.mxu0
  %214 = vmatprep.mubr.f32.mxu0 0.0
  %215 = vmatmul.mubr.f32.gmra.mxu0 %v76
  %v216 = vpop.f32.mrf.mxu0
  %v217 = vadd.f32 %v51, %v216
  %v218 = vpop.f32.mrf.mxu0
  %219 = vmatprep.mubr.f32.mxu0 0.0
  %220 = vmatmul.mubr.f32.gmra.mxu0 %v79
  %v221 = vpop.f32.mrf.mxu0
  %v222 = vadd.f32 %v51, %v221
  %v223 = vpop.f32.mrf.mxu0
  %224 = vmatprep.mubr.f32.mxu0 0.0
  %225 = vmatmul.mubr.f32.gmra.mxu0 %v82
  %v226 = vpop.f32.mrf.mxu0
  %v227 = vadd.f32 %v51, %v226
  %v228 = vpop.f32.mrf.mxu0
  %229 = vmatprep.mubr.f32.mxu0 0.0
  %230 = vmatmul.mubr.f32.gmra.mxu0 %v85
  %v231 = vpop.f32.mrf.mxu0
  %v232 = vadd.f32 %v51, %v231
  %v233 = vpop.f32.mrf.mxu0
  %234 = vmatprep.mubr.f32.mxu0 0.0
  %235 = vmatmul.mubr.f32.gmra.mxu0 %v88
  %v236 = vpop.f32.mrf.mxu0
  %v237 = vadd.f32 %v51, %v236
  %v238 = vpop.f32.mrf.mxu0
  %239 = vmatprep.mubr.f32.mxu0 0.0
  %240 = vmatmul.mubr.f32.gmra.mxu0 %v91
  %v241 = vpop.f32.mrf.mxu0
  %v242 = vadd.f32 %v51, %v241
  %v243 = vpop.f32.mrf.mxu0
  %244 = vmatprep.mubr.f32.mxu0 0.0
  %245 = vmatmul.mubr.f32.gmra.mxu0 %v94
  %v246 = vpop.f32.mrf.mxu0
  %v247 = vadd.f32 %v51, %v246
  %v248 = vpop.f32.mrf.mxu0
  %249 = vmatprep.mubr.f32.mxu0 0.0
  %250 = vmatmul.mubr.f32.gmra.mxu0 %v97
  %v251 = vpop.f32.mrf.mxu0
  %v252 = vadd.f32 %v51, %v251
  %v253 = vpop.f32.mrf.mxu0
  %254 = vmatprep.mubr.f32.mxu0 0.0
  %255 = vmatmul.mubr.f32.gmra.mxu0 %v100
  %v256 = vpop.f32.mrf.mxu0
  %v257 = vadd.f32 %v51, %v256
  %v258 = vpop.f32.mrf.mxu0
  %259 = vmatprep.mubr.f32.mxu0 0.0
  %260 = vmatmul.mubr.f32.gmra.mxu0 %v103
  %v261 = vpop.f32.mrf.mxu0
  %v262 = vadd.f32 %v51, %v261
  %v263 = vpop.f32.mrf.mxu0
  %264 = vmatprep.mubr.f32.mxu0 0.0
  %265 = vmatmul.mubr.f32.gmra.mxu0 %v106
  %v266 = vpop.f32.mrf.mxu0
  %v267 = vadd.f32 %v51, %v266
  %v268 = vpop.f32.mrf.mxu0
  %269 = vmatprep.mubr.f32.mxu0 0.0
  %270 = vmatmul.mubr.f32.gmra.mxu0 %v109
  %v271 = vpop.f32.mrf.mxu0
  %v272 = vadd.f32 %v51, %v271
  %v273 = vpop.f32.mrf.mxu0
  %274 = vdwg.mxu0
  %v275 = vmax.f32 %v182, 0.0
  %v276 = vmax.f32 %v187, 0.0
  %v277 = vmax.f32 %v192, 0.0
  %v278 = vmax.f32 %v197, 0.0
  %v279 = vmax.f32 %v202, 0.0
  %v280 = vmax.f32 %v207, 0.0
  %v281 = vmax.f32 %v212, 0.0
  %v282 = vmax.f32 %v217, 0.0
  %v283 = vmax.f32 %v222, 0.0
  %v284 = vmax.f32 %v227, 0.0
  %v285 = vmax.f32 %v232, 0.0
  %v286 = vmax.f32 %v237, 0.0
  %v287 = vmax.f32 %v242, 0.0
  %v288 = vmax.f32 %v247, 0.0
  %v289 = vmax.f32 %v252, 0.0
  %v290 = vmax.f32 %v257, 0.0
  %v291 = vmax.f32 %v262, 0.0
  %v292 = vmax.f32 %v267, 0.0
  %v293 = vmax.f32 %v272, 0.0
  %v294 = vld [vmem:[%s3] sm:$0xff]
  %v295 = vld [vmem:[%s3 + $0x8] sm:$0xff]
  %v296 = vld [vmem:[%s3 + $0x10] sm:$0xff]
  %v297 = vld [vmem:[%s3 + $0x18] sm:$0xff]
  %v298 = vld [vmem:[%s3 + $0x20] sm:$0xff]
  %v299 = vld [vmem:[%s3 + $0x28] sm:$0xff]
  %v300 = vld [vmem:[%s3 + $0x30] sm:$0xff]
  %v301 = vld [vmem:[%s3 + $0x38] sm:$0xff]
  %v302 = vld [vmem:[%s3 + $0x40] sm:$0xff]
  %v303 = vld [vmem:[%s3 + $0x48] sm:$0xff]
  %v304 = vld [vmem:[%s3 + $0x50] sm:$0xff]
  %v305 = vld [vmem:[%s3 + $0x58] sm:$0xff]
  %v306 = vld [vmem:[%s3 + $0x60] sm:$0xff]
  %v307 = vld [vmem:[%s3 + $0x68] sm:$0xff]
  %v308 = vld [vmem:[%s3 + $0x70] sm:$0xff]
  %v309 = vld [vmem:[%s3 + $0x78] sm:$0xff]
  %v310 = vld [vmem:[%s4] sm:$0x1]
  %v312 = vlaneseq
  %v313 = vshrl.u32 %v312, 7
  %v314 = vsub.s32 0, %v313
  %v315 = vrot.slane %v310, %v314
  %317 = vmatprep.subr.mxu0 0.0
  %318 = vmatpush1.msra.mxu0 %v309
  %319 = vmatprep.subr.mxu0 0.0
  %320 = vmatpush1.msra.mxu0 %v308
  %321 = vmatprep.subr.mxu0 0.0
  %322 = vmatpush1.msra.mxu0 %v307
  %323 = vmatprep.subr.mxu0 0.0
  %324 = vmatpush1.msra.mxu0 %v306
  %325 = vmatprep.subr.mxu0 0.0
  %326 = vmatpush1.msra.mxu0 %v305
  %327 = vmatprep.subr.mxu0 0.0
  %328 = vmatpush1.msra.mxu0 %v304
  %329 = vmatprep.subr.mxu0 0.0
  %330 = vmatpush1.msra.mxu0 %v303
  %331 = vmatprep.subr.mxu0 0.0
  %332 = vmatpush1.msra.mxu0 %v302
  %333 = vmatprep.subr.mxu0 0.0
  %334 = vmatpush1.msra.mxu0 %v301
  %335 = vmatprep.subr.mxu0 0.0
  %336 = vmatpush1.msra.mxu0 %v300
  %337 = vmatprep.subr.mxu0 0.0
  %338 = vmatpush1.msra.mxu0 %v299
  %339 = vmatprep.subr.mxu0 0.0
  %340 = vmatpush1.msra.mxu0 %v298
  %341 = vmatprep.subr.mxu0 0.0
  %342 = vmatpush1.msra.mxu0 %v297
  %343 = vmatprep.subr.mxu0 0.0
  %344 = vmatpush1.msra.mxu0 %v296
  %345 = vmatprep.subr.mxu0 0.0
  %346 = vmatpush1.msra.mxu0 %v295
  %347 = vmatprep.subr.mxu0 0.0
  %348 = vmatpush1.msra.mxu0 %v294
  %349 = vmatprep.subr.mxu0 0.0
  %350 = vmatpush2.msra.mxu0 0.0
  %351 = vmatprep.subr.mxu0 0.0
  %352 = vmatpush2.msra.mxu0 0.0
  %353 = vmatprep.subr.mxu0 0.0
  %354 = vmatpush2.msra.mxu0 0.0
  %355 = vmatprep.subr.mxu0 0.0
  %356 = vmatpush2.msra.mxu0 0.0
  %357 = vmatprep.subr.mxu0 0.0
  %358 = vmatpush2.msra.mxu0 0.0
  %359 = vmatprep.subr.mxu0 0.0
  %360 = vmatpush2.msra.mxu0 0.0
  %361 = vmatprep.subr.mxu0 0.0
  %362 = vmatpush2.msra.mxu0 0.0
  %363 = vmatprep.subr.mxu0 0.0
  %364 = vmatpush2.msra.mxu0 0.0
  %365 = vmatprep.subr.mxu0 0.0
  %366 = vmatpush2.msra.mxu0 0.0
  %367 = vmatprep.subr.mxu0 0.0
  %368 = vmatpush2.msra.mxu0 0.0
  %369 = vmatprep.subr.mxu0 0.0
  %370 = vmatpush2.msra.mxu0 0.0
  %371 = vmatprep.subr.mxu0 0.0
  %372 = vmatpush2.msra.mxu0 0.0
  %373 = vmatprep.subr.mxu0 0.0
  %374 = vmatpush2.msra.mxu0 0.0
  %375 = vmatprep.subr.mxu0 0.0
  %376 = vmatpush2.msra.mxu0 0.0
  %377 = vmatprep.subr.mxu0 0.0
  %378 = vmatpush2.msra.mxu0 0.0
  %379 = vmatprep.subr.mxu0 0.0
  %380 = vmatpush2.msra.mxu0 0.0
  %381 = vmatprep.mubr.f32.mxu0 0.0
  %382 = vmatmul.mubr.f32.gmra.mxu0 %v275
  %v383 = vpop.f32.mrf.mxu0
  %v384 = vadd.f32 %v315, %v383
  %v385 = vpop.f32.mrf.mxu0
  %386 = vmatprep.mubr.f32.mxu0 0.0
  %387 = vmatmul.mubr.f32.gmra.mxu0 %v276
  %v388 = vpop.f32.mrf.mxu0
  %v389 = vadd.f32 %v315, %v388
  %v390 = vpop.f32.mrf.mxu0
  %391 = vmatprep.mubr.f32.mxu0 0.0
  %392 = vmatmul.mubr.f32.gmra.mxu0 %v277
  %v393 = vpop.f32.mrf.mxu0
  %v394 = vadd.f32 %v315, %v393
  %v395 = vpop.f32.mrf.mxu0
  %396 = vmatprep.mubr.f32.mxu0 0.0
  %397 = vmatmul.mubr.f32.gmra.mxu0 %v278
  %v398 = vpop.f32.mrf.mxu0
  %v399 = vadd.f32 %v315, %v398
  %v400 = vpop.f32.mrf.mxu0
  %401 = vmatprep.mubr.f32.mxu0 0.0
  %402 = vmatmul.mubr.f32.gmra.mxu0 %v279
  %v403 = vpop.f32.mrf.mxu0
  %v404 = vadd.f32 %v315, %v403
  %v405 = vpop.f32.mrf.mxu0
  %406 = vmatprep.mubr.f32.mxu0 0.0
  %407 = vmatmul.mubr.f32.gmra.mxu0 %v280
  %v408 = vpop.f32.mrf.mxu0
  %v409 = vadd.f32 %v315, %v408
  %v410 = vpop.f32.mrf.mxu0
  %411 = vmatprep.mubr.f32.mxu0 0.0
  %412 = vmatmul.mubr.f32.gmra.mxu0 %v281
  %v413 = vpop.f32.mrf.mxu0
  %v414 = vadd.f32 %v315, %v413
  %v415 = vpop.f32.mrf.mxu0
  %416 = vmatprep.mubr.f32.mxu0 0.0
  %417 = vmatmul.mubr.f32.gmra.mxu0 %v282
  %v418 = vpop.f32.mrf.mxu0
  %v419 = vadd.f32 %v315, %v418
  %v420 = vpop.f32.mrf.mxu0
  %421 = vmatprep.mubr.f32.mxu0 0.0
  %422 = vmatmul.mubr.f32.gmra.mxu0 %v283
  %v423 = vpop.f32.mrf.mxu0
  %v424 = vadd.f32 %v315, %v423
  %v425 = vpop.f32.mrf.mxu0
  %426 = vmatprep.mubr.f32.mxu0 0.0
  %427 = vmatmul.mubr.f32.gmra.mxu0 %v284
  %v428 = vpop.f32.mrf.mxu0
  %v429 = vadd.f32 %v315, %v428
  %v430 = vpop.f32.mrf.mxu0
  %431 = vmatprep.mubr.f32.mxu0 0.0
  %432 = vmatmul.mubr.f32.gmra.mxu0 %v285
  %v433 = vpop.f32.mrf.mxu0
  %v434 = vadd.f32 %v315, %v433
  %v435 = vpop.f32.mrf.mxu0
  %436 = vmatprep.mubr.f32.mxu0 0.0
  %437 = vmatmul.mubr.f32.gmra.mxu0 %v286
  %v438 = vpop.f32.mrf.mxu0
  %v439 = vadd.f32 %v315, %v438
  %v440 = vpop.f32.mrf.mxu0
  %441 = vmatprep.mubr.f32.mxu0 0.0
  %442 = vmatmul.mubr.f32.gmra.mxu0 %v287
  %v443 = vpop.f32.mrf.mxu0
  %v444 = vadd.f32 %v315, %v443
  %v445 = vpop.f32.mrf.mxu0
  %446 = vmatprep.mubr.f32.mxu0 0.0
  %447 = vmatmul.mubr.f32.gmra.mxu0 %v288
  %v448 = vpop.f32.mrf.mxu0
  %v449 = vadd.f32 %v315, %v448
  %v450 = vpop.f32.mrf.mxu0
  %451 = vmatprep.mubr.f32.mxu0 0.0
  %452 = vmatmul.mubr.f32.gmra.mxu0 %v289
  %v453 = vpop.f32.mrf.mxu0
  %v454 = vadd.f32 %v315, %v453
  %v455 = vpop.f32.mrf.mxu0
  %456 = vmatprep.mubr.f32.mxu0 0.0
  %457 = vmatmul.mubr.f32.gmra.mxu0 %v290
  %v458 = vpop.f32.mrf.mxu0
  %v459 = vadd.f32 %v315, %v458
  %v460 = vpop.f32.mrf.mxu0
  %461 = vmatprep.mubr.f32.mxu0 0.0
  %462 = vmatmul.mubr.f32.gmra.mxu0 %v291
  %v463 = vpop.f32.mrf.mxu0
  %v464 = vadd.f32 %v315, %v463
  %v465 = vpop.f32.mrf.mxu0
  %466 = vmatprep.mubr.f32.mxu0 0.0
  %467 = vmatmul.mubr.f32.gmra.mxu0 %v292
  %v468 = vpop.f32.mrf.mxu0
  %v469 = vadd.f32 %v315, %v468
  %v470 = vpop.f32.mrf.mxu0
  %471 = vmatprep.mubr.f32.mxu0 0.0
  %472 = vmatmul.mubr.f32.gmra.mxu0 %v293
  %v473 = vpop.f32.mrf.mxu0
  %v474 = vadd.f32 %v315, %v473
  %v475 = vpop.f32.mrf.mxu0
  %476 = vdwg.mxu0
  %v477 = vmax.f32 %v384, 0.0
  %v478 = vmax.f32 %v389, 0.0
  %v479 = vmax.f32 %v394, 0.0
  %v480 = vmax.f32 %v399, 0.0
  %v481 = vmax.f32 %v404, 0.0
  %v482 = vmax.f32 %v409, 0.0
  %v483 = vmax.f32 %v414, 0.0
  %v484 = vmax.f32 %v419, 0.0
  %v485 = vmax.f32 %v424, 0.0
  %v486 = vmax.f32 %v429, 0.0
  %v487 = vmax.f32 %v434, 0.0
  %v488 = vmax.f32 %v439, 0.0
  %v489 = vmax.f32 %v444, 0.0
  %v490 = vmax.f32 %v449, 0.0
  %v491 = vmax.f32 %v454, 0.0
  %v492 = vmax.f32 %v459, 0.0
  %v493 = vmax.f32 %v464, 0.0
  %v494 = vmax.f32 %v469, 0.0
  %v495 = vmax.f32 %v474, 0.0
  %v496 = vld [vmem:[%s5] sm:$0xff]
  %v497 = vld [vmem:[%s5 + $0x8] sm:$0xff]
  %v498 = vld [vmem:[%s5 + $0x10] sm:$0xff]
  %v499 = vld [vmem:[%s5 + $0x18] sm:$0xff]
  %v500 = vld [vmem:[%s5 + $0x20] sm:$0xff]
  %v501 = vld [vmem:[%s5 + $0x28] sm:$0xff]
  %v502 = vld [vmem:[%s5 + $0x30] sm:$0xff]
  %v503 = vld [vmem:[%s5 + $0x38] sm:$0xff]
  %v504 = vld [vmem:[%s5 + $0x40] sm:$0xff]
  %v505 = vld [vmem:[%s5 + $0x48] sm:$0xff]
  %v506 = vld [vmem:[%s5 + $0x50] sm:$0xff]
  %v507 = vld [vmem:[%s5 + $0x58] sm:$0xff]
  %v508 = vld [vmem:[%s5 + $0x60] sm:$0xff]
  %v509 = vld [vmem:[%s5 + $0x68] sm:$0xff]
  %v510 = vld [vmem:[%s5 + $0x70] sm:$0xff]
  %v511 = vld [vmem:[%s5 + $0x78] sm:$0xff]
  %v512 = vld [vmem:[%s6] sm:$0x1]
  %v514 = vlaneseq
  %v515 = vshrl.u32 %v514, 7
  %v516 = vsub.s32 0, %v515
  %v517 = vrot.slane %v512, %v516
  %519 = vmatprep.subr.mxu0 0.0
  %520 = vmatpush1.msra.mxu0 %v511
  %521 = vmatprep.subr.mxu0 0.0
  %522 = vmatpush1.msra.mxu0 %v510
  %523 = vmatprep.subr.mxu0 0.0
  %524 = vmatpush1.msra.mxu0 %v509
  %525 = vmatprep.subr.mxu0 0.0
  %526 = vmatpush1.msra.mxu0 %v508
  %527 = vmatprep.subr.mxu0 0.0
  %528 = vmatpush1.msra.mxu0 %v507
  %529 = vmatprep.subr.mxu0 0.0
  %530 = vmatpush1.msra.mxu0 %v506
  %531 = vmatprep.subr.mxu0 0.0
  %532 = vmatpush1.msra.mxu0 %v505
  %533 = vmatprep.subr.mxu0 0.0
  %534 = vmatpush1.msra.mxu0 %v504
  %535 = vmatprep.subr.mxu0 0.0
  %536 = vmatpush1.msra.mxu0 %v503
  %537 = vmatprep.subr.mxu0 0.0
  %538 = vmatpush1.msra.mxu0 %v502
  %539 = vmatprep.subr.mxu0 0.0
  %540 = vmatpush1.msra.mxu0 %v501
  %541 = vmatprep.subr.mxu0 0.0
  %542 = vmatpush1.msra.mxu0 %v500
  %543 = vmatprep.subr.mxu0 0.0
  %544 = vmatpush1.msra.mxu0 %v499
  %545 = vmatprep.subr.mxu0 0.0
  %546 = vmatpush1.msra.mxu0 %v498
  %547 = vmatprep.subr.mxu0 0.0
  %548 = vmatpush1.msra.mxu0 %v497
  %549 = vmatprep.subr.mxu0 0.0
  %550 = vmatpush1.msra.mxu0 %v496
  %551 = vmatprep.subr.mxu0 0.0
  %552 = vmatpush2.msra.mxu0 0.0
  %553 = vmatprep.subr.mxu0 0.0
  %554 = vmatpush2.msra.mxu0 0.0
  %555 = vmatprep.subr.mxu0 0.0
  %556 = vmatpush2.msra.mxu0 0.0
  %557 = vmatprep.subr.mxu0 0.0
  %558 = vmatpush2.msra.mxu0 0.0
  %559 = vmatprep.subr.mxu0 0.0
  %560 = vmatpush2.msra.mxu0 0.0
  %561 = vmatprep.subr.mxu0 0.0
  %562 = vmatpush2.msra.mxu0 0.0
  %563 = vmatprep.subr.mxu0 0.0
  %564 = vmatpush2.msra.mxu0 0.0
  %565 = vmatprep.subr.mxu0 0.0
  %566 = vmatpush2.msra.mxu0 0.0
  %567 = vmatprep.subr.mxu0 0.0
  %568 = vmatpush2.msra.mxu0 0.0
  %569 = vmatprep.subr.mxu0 0.0
  %570 = vmatpush2.msra.mxu0 0.0
  %571 = vmatprep.subr.mxu0 0.0
  %572 = vmatpush2.msra.mxu0 0.0
  %573 = vmatprep.subr.mxu0 0.0
  %574 = vmatpush2.msra.mxu0 0.0
  %575 = vmatprep.subr.mxu0 0.0
  %576 = vmatpush2.msra.mxu0 0.0
  %577 = vmatprep.subr.mxu0 0.0
  %578 = vmatpush2.msra.mxu0 0.0
  %579 = vmatprep.subr.mxu0 0.0
  %580 = vmatpush2.msra.mxu0 0.0
  %581 = vmatprep.subr.mxu0 0.0
  %582 = vmatpush2.msra.mxu0 0.0
  %583 = vmatprep.mubr.f32.mxu0 0.0
  %584 = vmatmul.mubr.f32.gmra.mxu0 %v477
  %v585 = vpop.f32.mrf.mxu0
  %v586 = vadd.f32 %v517, %v585
  %v587 = vpop.f32.mrf.mxu0
  %588 = vmatprep.mubr.f32.mxu0 0.0
  %589 = vmatmul.mubr.f32.gmra.mxu0 %v478
  %v590 = vpop.f32.mrf.mxu0
  %v591 = vadd.f32 %v517, %v590
  %v592 = vpop.f32.mrf.mxu0
  %593 = vmatprep.mubr.f32.mxu0 0.0
  %594 = vmatmul.mubr.f32.gmra.mxu0 %v479
  %v595 = vpop.f32.mrf.mxu0
  %v596 = vadd.f32 %v517, %v595
  %v597 = vpop.f32.mrf.mxu0
  %598 = vmatprep.mubr.f32.mxu0 0.0
  %599 = vmatmul.mubr.f32.gmra.mxu0 %v480
  %v600 = vpop.f32.mrf.mxu0
  %v601 = vadd.f32 %v517, %v600
  %v602 = vpop.f32.mrf.mxu0
  %603 = vmatprep.mubr.f32.mxu0 0.0
  %604 = vmatmul.mubr.f32.gmra.mxu0 %v481
  %v605 = vpop.f32.mrf.mxu0
  %v606 = vadd.f32 %v517, %v605
  %v607 = vpop.f32.mrf.mxu0
  %608 = vmatprep.mubr.f32.mxu0 0.0
  %609 = vmatmul.mubr.f32.gmra.mxu0 %v482
  %v610 = vpop.f32.mrf.mxu0
  %v611 = vadd.f32 %v517, %v610
  %v612 = vpop.f32.mrf.mxu0
  %613 = vmatprep.mubr.f32.mxu0 0.0
  %614 = vmatmul.mubr.f32.gmra.mxu0 %v483
  %v615 = vpop.f32.mrf.mxu0
  %v616 = vadd.f32 %v517, %v615
  %v617 = vpop.f32.mrf.mxu0
  %618 = vmatprep.mubr.f32.mxu0 0.0
  %619 = vmatmul.mubr.f32.gmra.mxu0 %v484
  %v620 = vpop.f32.mrf.mxu0
  %v621 = vadd.f32 %v517, %v620
  %v622 = vpop.f32.mrf.mxu0
  %623 = vmatprep.mubr.f32.mxu0 0.0
  %624 = vmatmul.mubr.f32.gmra.mxu0 %v485
  %v625 = vpop.f32.mrf.mxu0
  %v626 = vadd.f32 %v517, %v625
  %v627 = vpop.f32.mrf.mxu0
  %628 = vmatprep.mubr.f32.mxu0 0.0
  %629 = vmatmul.mubr.f32.gmra.mxu0 %v486
  %v630 = vpop.f32.mrf.mxu0
  %v631 = vadd.f32 %v517, %v630
  %v632 = vpop.f32.mrf.mxu0
  %633 = vmatprep.mubr.f32.mxu0 0.0
  %634 = vmatmul.mubr.f32.gmra.mxu0 %v487
  %v635 = vpop.f32.mrf.mxu0
  %v636 = vadd.f32 %v517, %v635
  %v637 = vpop.f32.mrf.mxu0
  %638 = vmatprep.mubr.f32.mxu0 0.0
  %639 = vmatmul.mubr.f32.gmra.mxu0 %v488
  %v640 = vpop.f32.mrf.mxu0
  %v641 = vadd.f32 %v517, %v640
  %v642 = vpop.f32.mrf.mxu0
  %643 = vmatprep.mubr.f32.mxu0 0.0
  %644 = vmatmul.mubr.f32.gmra.mxu0 %v489
  %v645 = vpop.f32.mrf.mxu0
  %v646 = vadd.f32 %v517, %v645
  %v647 = vpop.f32.mrf.mxu0
  %648 = vmatprep.mubr.f32.mxu0 0.0
  %649 = vmatmul.mubr.f32.gmra.mxu0 %v490
  %v650 = vpop.f32.mrf.mxu0
  %v651 = vadd.f32 %v517, %v650
  %v652 = vpop.f32.mrf.mxu0
  %653 = vmatprep.mubr.f32.mxu0 0.0
  %654 = vmatmul.mubr.f32.gmra.mxu0 %v491
  %v655 = vpop.f32.mrf.mxu0
  %v656 = vadd.f32 %v517, %v655
  %v657 = vpop.f32.mrf.mxu0
  %658 = vmatprep.mubr.f32.mxu0 0.0
  %659 = vmatmul.mubr.f32.gmra.mxu0 %v492
  %v660 = vpop.f32.mrf.mxu0
  %v661 = vadd.f32 %v517, %v660
  %v662 = vpop.f32.mrf.mxu0
  %663 = vmatprep.mubr.f32.mxu0 0.0
  %664 = vmatmul.mubr.f32.gmra.mxu0 %v493
  %v665 = vpop.f32.mrf.mxu0
  %v666 = vadd.f32 %v517, %v665
  %v667 = vpop.f32.mrf.mxu0
  %668 = vmatprep.mubr.f32.mxu0 0.0
  %669 = vmatmul.mubr.f32.gmra.mxu0 %v494
  %v670 = vpop.f32.mrf.mxu0
  %v671 = vadd.f32 %v517, %v670
  %v672 = vpop.f32.mrf.mxu0
  %673 = vmatprep.mubr.f32.mxu0 0.0
  %674 = vmatmul.mubr.f32.gmra.mxu0 %v495
  %v675 = vpop.f32.mrf.mxu0
  %v676 = vadd.f32 %v517, %v675
  %v677 = vpop.f32.mrf.mxu0
  %678 = vdwg.mxu0
  %vm679 = vcmask 64512
  %680 = vst.msk [vmem:[%s7] sm:$0xff] %vm679, %v586
  %681 = vst.msk [vmem:[%s7 + $0x8] sm:$0xff] %vm679, %v591
  %682 = vst.msk [vmem:[%s7 + $0x10] sm:$0xff] %vm679, %v596
  %683 = vst.msk [vmem:[%s7 + $0x18] sm:$0xff] %vm679, %v601
  %684 = vst.msk [vmem:[%s7 + $0x20] sm:$0xff] %vm679, %v606
  %685 = vst.msk [vmem:[%s7 + $0x28] sm:$0xff] %vm679, %v611
  %686 = vst.msk [vmem:[%s7 + $0x30] sm:$0xff] %vm679, %v616
  %687 = vst.msk [vmem:[%s7 + $0x38] sm:$0xff] %vm679, %v621
  %688 = vst.msk [vmem:[%s7 + $0x40] sm:$0xff] %vm679, %v626
  %689 = vst.msk [vmem:[%s7 + $0x48] sm:$0xff] %vm679, %v631
  %690 = vst.msk [vmem:[%s7 + $0x50] sm:$0xff] %vm679, %v636
  %691 = vst.msk [vmem:[%s7 + $0x58] sm:$0xff] %vm679, %v641
  %692 = vst.msk [vmem:[%s7 + $0x60] sm:$0xff] %vm679, %v646
  %693 = vst.msk [vmem:[%s7 + $0x68] sm:$0xff] %vm679, %v651
  %694 = vst.msk [vmem:[%s7 + $0x70] sm:$0xff] %vm679, %v656
  %695 = vst.msk [vmem:[%s7 + $0x78] sm:$0xff] %vm679, %v661
  %696 = vst.msk [vmem:[%s7 + $0x80] sm:$0xff] %vm679, %v666
  %697 = vst.msk [vmem:[%s7 + $0x88] sm:$0xff] %vm679, %v671
  %vm698 = vcmask 62464
  %699 = vst.msk [vmem:[%s7 + $0x90] sm:$0x3f] %vm698, %v676
  // Predicated region
  $region30: #{_mlp_single.1} parent=0 // pred_check
    _
  $region31: #{_mlp_single.1} parent=0 // pred_check_branch
    %701 = sbr.rel (0) target = $region33
  $region32: #{_mlp_single.1} parent=0 // pred_region
    _
  $region33: #{_mlp_single.1} parent=0 // pred_fallthru
    _
  // Predicated region
  $region34: #{_mlp_single.1} parent=0 // pred_check
    _
  $region35: #{_mlp_single.1} parent=0 // pred_check_branch
    %703 = sbr.rel (0) target = $region37
  $region36: #{_mlp_single.1} parent=0 // pred_region
    _
  $region37: #{_mlp_single.1} parent=0 // pred_fallthru
    _

</llo_original>
